<compile_context>
chip_gen: v5e
topology: v5e:2x2
jax: 0.10.0
libtpu: 0.0.40
codegen_flags: <defaults>
</compile_context>

<pallas_src>
import jax
import jax.numpy as jnp
from jax import lax
from jax.experimental import pallas as pl
from jax.experimental.pallas import tpu as pltpu


def rnn_classifier_kernel(ids_ref, eproj_ref, whh_ref, wo_ref, bo_ref, out_ref):
    seq_len = ids_ref.shape[0]
    vocab, d = eproj_ref.shape

    # ---- One-hot gather of the pre-projected embedding rows (single MXU pass) ----
    # onehot[t, v] = (ids[t] == v);  x_proj = onehot @ (emb @ W_xh + b_h)
    iota = lax.broadcasted_iota(jnp.int32, (seq_len, vocab), 1)
    onehot = (iota == ids_ref[...]).astype(jnp.float32)              # (seq, vocab)
    x_proj = jnp.dot(onehot, eproj_ref[...],
                     preferred_element_type=jnp.float32)             # (seq, D)

    # ---- Recurrence: only h @ W_hh remains on the serialized path ----
    # Static Python loop + static slices: no per-step dynamic address math.
    whh = whh_ref[...]
    h = jnp.zeros((1, d), jnp.float32)
    for t in range(seq_len):                                         # seq_len is static
        pre = x_proj[t:t + 1, :] + jnp.dot(h, whh,
                                           preferred_element_type=jnp.float32)
        h = jnp.tanh(pre)

    # ---- Output head on the LAST hidden state (== pred[senL - 1]) ----
    logits = (jnp.dot(h, wo_ref[...], preferred_element_type=jnp.float32)
              + bo_ref[...])                                          # (1, O)
    m = jnp.max(logits, axis=-1, keepdims=True)
    e = jnp.exp(logits - m)
    out_ref[...] = e / jnp.sum(e, axis=-1, keepdims=True)            # exact divide


def rnn_classifier_forward(token_ids, emb, w_xh, w_hh, b_h, w_o, b_o):
    vocab = emb.shape[0]
    out_dim = w_o.shape[1]

    # Exact hoist: emb[ids] @ W_xh + b_h == (emb @ W_xh + b_h)[ids].
    # Weights are static across calls, so this is one-time precompute.
    e_proj = (emb @ w_xh + b_h).astype(jnp.float32)                  # (vocab, D)

    # Clamp ids host-side (mirrors create_mapping routing unknowns to a valid
    # row) and pass them as a tiny (seq, 1) int32 column for the one-hot.
    ids = jnp.clip(token_ids, 0, vocab - 1).astype(jnp.int32).reshape(-1, 1)

    vmem = pl.BlockSpec(memory_space=pltpu.MemorySpace.VMEM)
    out = pl.pallas_call(
        rnn_classifier_kernel,
        out_shape=jax.ShapeDtypeStruct((1, out_dim), jnp.float32),
        in_specs=[vmem, vmem, vmem, vmem, vmem],
        out_specs=vmem,
    )(ids, e_proj, w_hh, w_o, b_o)
    return out[0]                                                     # (outDim,)


def reference_forward(token_ids, emb, w_xh, w_hh, b_h, w_o, b_o):
    # Pure-JAX reference mirroring the PyTorch module.
    x_seq = emb[token_ids]                                            # (seq, D)
    h = jnp.zeros((emb.shape[1],), jnp.float32)

    def step(h, x):
        h_new = jnp.tanh(x @ w_xh + h @ w_hh + b_h[0])
        return h_new, h_new

    h_last, _ = lax.scan(step, h, x_seq)
    logits = h_last @ w_o + b_o[0]
    return jax.nn.softmax(logits)


if __name__ == "__main__":
    # Small shapes consistent with the module:
    vocab_size = 32      # len(vocab)
    rnn_dim = 32         # rnnDim
    out_dim = 4          # outputDim (number of labels)
    seq_len = 8          # len(X) == senL

    key = jax.random.PRNGKey(0)
    k_emb, k_xh, k_hh, k_bh, k_o, k_bo, k_ids = jax.random.split(key, 7)

    # Deterministic synthetic parameters (shapes from Model.__init__).
    emb  = 0.1 * jax.random.normal(k_emb, (vocab_size, rnn_dim), jnp.float32)
    w_xh = 0.1 * jax.random.normal(k_xh, (rnn_dim, rnn_dim), jnp.float32)
    w_hh = 0.1 * jax.random.normal(k_hh, (rnn_dim, rnn_dim), jnp.float32)
    b_h  = 0.1 * jax.random.normal(k_bh, (1, rnn_dim), jnp.float32)
    w_o  = 0.1 * jax.random.normal(k_o, (rnn_dim, out_dim), jnp.float32)
    b_o  = 0.1 * jax.random.normal(k_bo, (1, out_dim), jnp.float32)

    # Token ids stand in for create_mapping(vocab, X) (word -> index is host-side glue).
    token_ids = jax.random.randint(k_ids, (seq_len,), 0, vocab_size, dtype=jnp.int32)

    out = rnn_classifier_forward(token_ids, emb, w_xh, w_hh, b_h, w_o, b_o)
    out = jax.block_until_ready(out)

    ref = reference_forward(token_ids, emb, w_xh, w_hh, b_h, w_o, b_o)
    assert out.shape == (out_dim,)
    assert jnp.allclose(out, ref, atol=1e-5, rtol=1e-5), (out, ref)

    print("KERNEL_OK")
</pallas_src>

<mosaic_0001>
module attributes {stable_mosaic.version = 11 : i64} {
  func.func @rnn_classifier_kernel(%arg0: memref<8x1xi32, #tpu.memory_space<vmem>>, %arg1: memref<32x32xf32, #tpu.memory_space<vmem>>, %arg2: memref<32x32xf32, #tpu.memory_space<vmem>>, %arg3: memref<32x4xf32, #tpu.memory_space<vmem>>, %arg4: memref<1x4xf32, #tpu.memory_space<vmem>>, %arg5: memref<1x4xf32, #tpu.memory_space<vmem>>) attributes {dimension_semantics = [], scalar_prefetch = 0 : i64, scratch_operands = 0 : i64, tpu.core_type = #tpu.core_type<tc>} {
    %0 = tpu.iota {dimensions = array<i32: 1>} : vector<8x32xi32>
    %c0 = arith.constant 0 : index
    %c0_0 = arith.constant 0 : index
    %1 = vector.load %arg0[%c0, %c0_0] : memref<8x1xi32, #tpu.memory_space<vmem>>, vector<8x1xi32>
    %2 = vector.broadcast %1 : vector<8x1xi32> to vector<8x32xi32>
    %3 = arith.cmpi eq, %0, %2 : vector<8x32xi32>
    %4 = arith.extui %3 : vector<8x32xi1> to vector<8x32xi32>
    %5 = arith.sitofp %4 : vector<8x32xi32> to vector<8x32xf32>
    %c0_1 = arith.constant 0 : index
    %c0_2 = arith.constant 0 : index
    %6 = vector.load %arg1[%c0_1, %c0_2] : memref<32x32xf32, #tpu.memory_space<vmem>>, vector<32x32xf32>
    %cst = arith.constant dense<0.000000e+00> : vector<8x32xf32>
    %7 = tpu.matmul %5, %6, %cst {dimension_numbers = #tpu.dot_dimension_numbers<[1], [0], [0], [1], [0, 0, 1, 1], [], []>} : vector<8x32xf32>, vector<32x32xf32>, vector<8x32xf32> -> vector<8x32xf32>
    %c0_3 = arith.constant 0 : index
    %c0_4 = arith.constant 0 : index
    %8 = vector.load %arg2[%c0_3, %c0_4] : memref<32x32xf32, #tpu.memory_space<vmem>>, vector<32x32xf32>
    %cst_5 = arith.constant 0.000000e+00 : f32
    %9 = vector.broadcast %cst_5 : f32 to vector<1x32xf32>
    %10 = vector.extract_strided_slice %7 {offsets = [0, 0], sizes = [1, 32], strides = [1, 1]} : vector<8x32xf32> to vector<1x32xf32>
    %cst_6 = arith.constant dense<0.000000e+00> : vector<1x32xf32>
    %11 = tpu.matmul %9, %8, %cst_6 {dimension_numbers = #tpu.dot_dimension_numbers<[1], [0], [0], [1], [0, 0, 1, 1], [], []>} : vector<1x32xf32>, vector<32x32xf32>, vector<1x32xf32> -> vector<1x32xf32>
    %12 = arith.addf %10, %11 : vector<1x32xf32>
    %13 = math.tanh %12 : vector<1x32xf32>
    %14 = vector.extract_strided_slice %7 {offsets = [1, 0], sizes = [1, 32], strides = [1, 1]} : vector<8x32xf32> to vector<1x32xf32>
    %cst_7 = arith.constant dense<0.000000e+00> : vector<1x32xf32>
    %15 = tpu.matmul %13, %8, %cst_7 {dimension_numbers = #tpu.dot_dimension_numbers<[1], [0], [0], [1], [0, 0, 1, 1], [], []>} : vector<1x32xf32>, vector<32x32xf32>, vector<1x32xf32> -> vector<1x32xf32>
    %16 = arith.addf %14, %15 : vector<1x32xf32>
    %17 = math.tanh %16 : vector<1x32xf32>
    %18 = vector.extract_strided_slice %7 {offsets = [2, 0], sizes = [1, 32], strides = [1, 1]} : vector<8x32xf32> to vector<1x32xf32>
    %cst_8 = arith.constant dense<0.000000e+00> : vector<1x32xf32>
    %19 = tpu.matmul %17, %8, %cst_8 {dimension_numbers = #tpu.dot_dimension_numbers<[1], [0], [0], [1], [0, 0, 1, 1], [], []>} : vector<1x32xf32>, vector<32x32xf32>, vector<1x32xf32> -> vector<1x32xf32>
    %20 = arith.addf %18, %19 : vector<1x32xf32>
    %21 = math.tanh %20 : vector<1x32xf32>
    %22 = vector.extract_strided_slice %7 {offsets = [3, 0], sizes = [1, 32], strides = [1, 1]} : vector<8x32xf32> to vector<1x32xf32>
    %cst_9 = arith.constant dense<0.000000e+00> : vector<1x32xf32>
    %23 = tpu.matmul %21, %8, %cst_9 {dimension_numbers = #tpu.dot_dimension_numbers<[1], [0], [0], [1], [0, 0, 1, 1], [], []>} : vector<1x32xf32>, vector<32x32xf32>, vector<1x32xf32> -> vector<1x32xf32>
    %24 = arith.addf %22, %23 : vector<1x32xf32>
    %25 = math.tanh %24 : vector<1x32xf32>
    %26 = vector.extract_strided_slice %7 {offsets = [4, 0], sizes = [1, 32], strides = [1, 1]} : vector<8x32xf32> to vector<1x32xf32>
    %cst_10 = arith.constant dense<0.000000e+00> : vector<1x32xf32>
    %27 = tpu.matmul %25, %8, %cst_10 {dimension_numbers = #tpu.dot_dimension_numbers<[1], [0], [0], [1], [0, 0, 1, 1], [], []>} : vector<1x32xf32>, vector<32x32xf32>, vector<1x32xf32> -> vector<1x32xf32>
    %28 = arith.addf %26, %27 : vector<1x32xf32>
    %29 = math.tanh %28 : vector<1x32xf32>
    %30 = vector.extract_strided_slice %7 {offsets = [5, 0], sizes = [1, 32], strides = [1, 1]} : vector<8x32xf32> to vector<1x32xf32>
    %cst_11 = arith.constant dense<0.000000e+00> : vector<1x32xf32>
    %31 = tpu.matmul %29, %8, %cst_11 {dimension_numbers = #tpu.dot_dimension_numbers<[1], [0], [0], [1], [0, 0, 1, 1], [], []>} : vector<1x32xf32>, vector<32x32xf32>, vector<1x32xf32> -> vector<1x32xf32>
    %32 = arith.addf %30, %31 : vector<1x32xf32>
    %33 = math.tanh %32 : vector<1x32xf32>
    %34 = vector.extract_strided_slice %7 {offsets = [6, 0], sizes = [1, 32], strides = [1, 1]} : vector<8x32xf32> to vector<1x32xf32>
    %cst_12 = arith.constant dense<0.000000e+00> : vector<1x32xf32>
    %35 = tpu.matmul %33, %8, %cst_12 {dimension_numbers = #tpu.dot_dimension_numbers<[1], [0], [0], [1], [0, 0, 1, 1], [], []>} : vector<1x32xf32>, vector<32x32xf32>, vector<1x32xf32> -> vector<1x32xf32>
    %36 = arith.addf %34, %35 : vector<1x32xf32>
    %37 = math.tanh %36 : vector<1x32xf32>
    %38 = vector.extract_strided_slice %7 {offsets = [7, 0], sizes = [1, 32], strides = [1, 1]} : vector<8x32xf32> to vector<1x32xf32>
    %cst_13 = arith.constant dense<0.000000e+00> : vector<1x32xf32>
    %39 = tpu.matmul %37, %8, %cst_13 {dimension_numbers = #tpu.dot_dimension_numbers<[1], [0], [0], [1], [0, 0, 1, 1], [], []>} : vector<1x32xf32>, vector<32x32xf32>, vector<1x32xf32> -> vector<1x32xf32>
    %40 = arith.addf %38, %39 : vector<1x32xf32>
    %41 = math.tanh %40 : vector<1x32xf32>
    %c0_14 = arith.constant 0 : index
    %c0_15 = arith.constant 0 : index
    %42 = vector.load %arg3[%c0_14, %c0_15] : memref<32x4xf32, #tpu.memory_space<vmem>>, vector<32x4xf32>
    %cst_16 = arith.constant dense<0.000000e+00> : vector<1x4xf32>
    %43 = tpu.matmul %41, %42, %cst_16 {dimension_numbers = #tpu.dot_dimension_numbers<[1], [0], [0], [1], [0, 0, 1, 1], [], []>} : vector<1x32xf32>, vector<32x4xf32>, vector<1x4xf32> -> vector<1x4xf32>
    %c0_17 = arith.constant 0 : index
    %c0_18 = arith.constant 0 : index
    %44 = vector.load %arg4[%c0_17, %c0_18] : memref<1x4xf32, #tpu.memory_space<vmem>>, vector<1x4xf32>
    %45 = arith.addf %43, %44 : vector<1x4xf32>
    %cst_19 = arith.constant dense<0xFF800000> : vector<1xf32>
    %46 = vector.multi_reduction <maximumf>, %45, %cst_19 [1] : vector<1x4xf32> to vector<1xf32>
    %47 = vector.shape_cast %46 : vector<1xf32> to vector<1x1xf32>
    %48 = vector.broadcast %47 : vector<1x1xf32> to vector<1x4xf32>
    %49 = arith.subf %45, %48 : vector<1x4xf32>
    %50 = math.exp %49 : vector<1x4xf32>
    %cst_20 = arith.constant dense<0.000000e+00> : vector<1xf32>
    %51 = vector.multi_reduction <add>, %50, %cst_20 [1] : vector<1x4xf32> to vector<1xf32>
    %52 = vector.shape_cast %51 : vector<1xf32> to vector<1x1xf32>
    %53 = vector.broadcast %52 : vector<1x1xf32> to vector<1x4xf32>
    %54 = arith.divf %50, %53 : vector<1x4xf32>
    %c0_21 = arith.constant 0 : index
    %c0_22 = arith.constant 0 : index
    %55 = vector.load %arg5[%c0_21, %c0_22] : memref<1x4xf32, #tpu.memory_space<vmem>>, vector<1x4xf32>
    tpu.vector_store %arg5[%c0_21, %c0_22], %54 {strides = array<i32>} : memref<1x4xf32, #tpu.memory_space<vmem>>, vector<1x4xf32>,
    return
  }
}

</mosaic_0001>

<llo_original>
// kernel: tpu_custom_call.1
$region0: #{tpu_custom_call.1}
  #allocation0 [shape = 'u32[]', space=smem, size = 0x4, offset = 0x4, fixed_abs, tag = 'smem constant byte address 0x4 - core index']
  #allocation1 [shape = 'u32[72,128]{1,0:T(1,128)}', space=vmem, size = 0x9000, scoped, tag = 'internal scratch']
  %s0 = inlined_call_operand.vmem [shape: s32[8,1], index: 0, kind: input, shape index: {}]
  %s1 = inlined_call_operand.vmem [shape: f32[32,32], index: 1, kind: input, shape index: {}]
  %s2 = inlined_call_operand.hbm [shape: f32[32,32], index: 2, kind: input, shape index: {}]
  %s3 = inlined_call_operand.vmem [shape: f32[32,4], index: 3, kind: input, shape index: {}]
  %s4 = inlined_call_operand.vmem [shape: f32[1,4], index: 4, kind: input, shape index: {}]
  %s5 = inlined_call_operand.hbm [shape: f32[1,4], index: 5, kind: output, shape index: {}]
  %s6 = sld [smem:[#allocation0]]
  $region34: #{tpu_custom_call.1} parent=0
    _
  %s8 = ssub.s32 1, %s6
  %s9 = scalar_select 0, %s8, %s6
  $region1: #{tpu_custom_call.1} parent=0
    #allocation2 [shape = 'u8[16384]{0}', space=vmem, size = 0x4000, scoped, tag = 'input window, operand 2, single buffered']
    #allocation3 [shape = 's32[1]{0}', space=sflag, size = 0x4, scoped, tag = 'scoped memory for tpu_custom_call.1']
    #allocation4 [shape = 's32[1]{0}', space=sflag, size = 0x4, scoped, tag = 'scoped memory for tpu_custom_call.1']
    #allocation5 [shape = 'u8[512]{0}', space=vmem, size = 0x400, scoped, tag = 'output window, operand 0, single buffered']
    %10 = vsyncpa [#allocation3], 0
    %11 = vsyncpa [#allocation4], 0
    // Predicated region
    $region2: #{tpu_custom_call.1} parent=1 // pred_check
      _
    $region3: #{tpu_custom_call.1} parent=1 // pred_check_branch
      %13 = sbr.rel (0) target = $region5
    $region4: #{tpu_custom_call.1} parent=1 // pred_region
      _
    $region5: #{tpu_custom_call.1} parent=1 // pred_fallthru
      _
    // Predicated region
    $region6: #{tpu_custom_call.1} parent=1 // pred_check
      _
    $region7: #{tpu_custom_call.1} parent=1 // pred_check_branch
      %15 = sbr.rel (0) target = $region9
    $region8: #{tpu_custom_call.1} parent=1 // pred_region
      _
    $region9: #{tpu_custom_call.1} parent=1 // pred_fallthru
      _
    // Predicated region
    $region10: #{tpu_custom_call.1} parent=1 // pred_check
      _
    $region11: #{tpu_custom_call.1} parent=1 // pred_check_branch
      %17 = sbr.rel (0) target = $region13
    $region12: #{tpu_custom_call.1} parent=1 // pred_region
      %19 = vsyncadd [#allocation3], 0
      %s20 = sshll.u32 %s2, 4
      %s21 = int_to_ptr.hbm [resolvable:$true] %s20
      %s22 = sshll.u32 [#allocation2], 4
      %s23 = int_to_ptr.vmem [resolvable:$true] %s22
      %28 = dma.hbm_to_vmem [thread:$0]  %s21, 512, %s23, [#allocation3], 128, 128, 8
    $region13: #{tpu_custom_call.1} parent=1 // pred_fallthru
      _
    // Predicated region
    $region14: #{tpu_custom_call.1} parent=1 // pred_check
      _
    $region15: #{tpu_custom_call.1} parent=1 // pred_check_branch
      %30 = sbr.rel (0) target = $region17
    $region16: #{tpu_custom_call.1} parent=1 // pred_region
      _
    $region17: #{tpu_custom_call.1} parent=1 // pred_fallthru
      _
    // Predicated region
    $region18: #{tpu_custom_call.1} parent=1 // pred_check
      _
    $region19: #{tpu_custom_call.1} parent=1 // pred_check_branch
      %32 = sbr.rel (0) target = $region21
    $region20: #{tpu_custom_call.1} parent=1 // pred_region
      _
    $region21: #{tpu_custom_call.1} parent=1 // pred_fallthru
      _
    // Predicated region
    $region22: #{tpu_custom_call.1} parent=1 // pred_check
      _
    $region23: #{tpu_custom_call.1} parent=1 // pred_check_branch
      %34 = sbr.rel (0) target = $region25
    $region24: #{tpu_custom_call.1} parent=1 // pred_region
      %36 = dma.done [#allocation3], 512
    $region25: #{tpu_custom_call.1} parent=1 // pred_fallthru
      _
    %v37 = vlaneseq
    %v38 = vand.u32 %v37, 127
    %v39 = vld [vmem:[%s0] sm:$0xff]
    %40 = vset.pattern.permute.xlu0 0
    %41 = vperm.xlu0 %40, %v39
    %v42 = vpop.permute.xlu0 %41
    %vm43 = vcmp.eq.s32.totalorder %v38, %v42
    %v44 = vsel %vm43, 1, 0
    %v45 = vcvt.s32.f32 %v44
    %v46 = vld [vmem:[%s1] sm:$0xff]
    %v47 = vld [vmem:[%s1 + $0x8] sm:$0xff]
    %v48 = vld [vmem:[%s1 + $0x10] sm:$0xff]
    %v49 = vld [vmem:[%s1 + $0x18] sm:$0xff]
    %vm50 = vcmask 261120
    %v52 = vsel %vm50, %v45, 0
    %54 = vmatpush.msra.mxu0 0.0
    %55 = vmatpush.msra.mxu0 0.0
    %56 = vmatpush.msra.mxu0 0.0
    %57 = vmatpush.msra.mxu0 0.0
    %58 = vmatpush.msra.mxu0 0.0
    %59 = vmatpush.msra.mxu0 0.0
    %60 = vmatpush.msra.mxu0 0.0
    %61 = vmatpush.msra.mxu0 0.0
    %62 = vmatpush.msra.mxu0 0.0
    %63 = vmatpush.msra.mxu0 0.0
    %64 = vmatpush.msra.mxu0 0.0
    %65 = vmatpush.msra.mxu0 0.0
    %66 = vmatpush.msra.mxu0 %v49
    %67 = vmatpush.msra.mxu0 %v48
    %68 = vmatpush.msra.mxu0 %v47
    %69 = vmatpush.msra.mxu0 %v46
    %70 = vmatmul.f32.gmra.mxu0 %v52
    %v71 = vpop.f32.mrf.mxu0
    %v72 = vadd.f32 0.0, %v71
    %73 = vdwg.mxu0
    %v74 = vld [vmem:[#allocation2] sm:$0xff]
    %v75 = vld [vmem:[#allocation2 + $0x8] sm:$0xff]
    %v76 = vld [vmem:[#allocation2 + $0x10] sm:$0xff]
    %v77 = vld [vmem:[#allocation2 + $0x18] sm:$0xff]
    %v79 = vsel %vm50, 0.0, 0
    %81 = vmatpush.msra.mxu0 0.0
    %82 = vmatpush.msra.mxu0 0.0
    %83 = vmatpush.msra.mxu0 0.0
    %84 = vmatpush.msra.mxu0 0.0
    %85 = vmatpush.msra.mxu0 0.0
    %86 = vmatpush.msra.mxu0 0.0
    %87 = vmatpush.msra.mxu0 0.0
    %88 = vmatpush.msra.mxu0 0.0
    %89 = vmatpush.msra.mxu0 0.0
    %90 = vmatpush.msra.mxu0 0.0
    %91 = vmatpush.msra.mxu0 0.0
    %92 = vmatpush.msra.mxu0 0.0
    %93 = vmatpush.msra.mxu0 %v77
    %94 = vmatpush.msra.mxu0 %v76
    %95 = vmatpush.msra.mxu0 %v75
    %96 = vmatpush.msra.mxu0 %v74
    %97 = vmatmul.f32.gmra.mxu0 %v79
    %v98 = vpop.f32.mrf.mxu0
    %v99 = vadd.f32 0.0, %v98
    %100 = vdwg.mxu0
    %v101 = vadd.f32 %v72, %v99
    %v102 = vtanh.pop %v101
    %v104 = vsel %vm50, %v102, 0
    %106 = vmatpush.msra.mxu0 0.0
    %107 = vmatpush.msra.mxu0 0.0
    %108 = vmatpush.msra.mxu0 0.0
    %109 = vmatpush.msra.mxu0 0.0
    %110 = vmatpush.msra.mxu0 0.0
    %111 = vmatpush.msra.mxu0 0.0
    %112 = vmatpush.msra.mxu0 0.0
    %113 = vmatpush.msra.mxu0 0.0
    %114 = vmatpush.msra.mxu0 0.0
    %115 = vmatpush.msra.mxu0 0.0
    %116 = vmatpush.msra.mxu0 0.0
    %117 = vmatpush.msra.mxu0 0.0
    %118 = vmatpush.msra.mxu0 %v77
    %119 = vmatpush.msra.mxu0 %v76
    %120 = vmatpush.msra.mxu0 %v75
    %121 = vmatpush.msra.mxu0 %v74
    %122 = vmatmul.f32.gmra.mxu0 %v104
    %v123 = vpop.f32.mrf.mxu0
    %v124 = vadd.f32 0.0, %v123
    %125 = vdwg.mxu0
    %v127 = vrot.slane %v124, 7
    %v129 = vadd.f32 %v72, %v127
    %v130 = vtanh.pop %v129
    %v132 = vrot.slane %v130, 1
    %v133 = vsel %vm50, %v132, 0
    %135 = vmatpush.msra.mxu0 0.0
    %136 = vmatpush.msra.mxu0 0.0
    %137 = vmatpush.msra.mxu0 0.0
    %138 = vmatpush.msra.mxu0 0.0
    %139 = vmatpush.msra.mxu0 0.0
    %140 = vmatpush.msra.mxu0 0.0
    %141 = vmatpush.msra.mxu0 0.0
    %142 = vmatpush.msra.mxu0 0.0
    %143 = vmatpush.msra.mxu0 0.0
    %144 = vmatpush.msra.mxu0 0.0
    %145 = vmatpush.msra.mxu0 0.0
    %146 = vmatpush.msra.mxu0 0.0
    %147 = vmatpush.msra.mxu0 %v77
    %148 = vmatpush.msra.mxu0 %v76
    %149 = vmatpush.msra.mxu0 %v75
    %150 = vmatpush.msra.mxu0 %v74
    %151 = vmatmul.f32.gmra.mxu0 %v133
    %v152 = vpop.f32.mrf.mxu0
    %v153 = vadd.f32 0.0, %v152
    %154 = vdwg.mxu0
    %v156 = vrot.slane %v153, 6
    %v158 = vadd.f32 %v72, %v156
    %v159 = vtanh.pop %v158
    %v161 = vrot.slane %v159, 2
    %v162 = vsel %vm50, %v161, 0
    %164 = vmatpush.msra.mxu0 0.0
    %165 = vmatpush.msra.mxu0 0.0
    %166 = vmatpush.msra.mxu0 0.0
    %167 = vmatpush.msra.mxu0 0.0
    %168 = vmatpush.msra.mxu0 0.0
    %169 = vmatpush.msra.mxu0 0.0
    %170 = vmatpush.msra.mxu0 0.0
    %171 = vmatpush.msra.mxu0 0.0
    %172 = vmatpush.msra.mxu0 0.0
    %173 = vmatpush.msra.mxu0 0.0
    %174 = vmatpush.msra.mxu0 0.0
    %175 = vmatpush.msra.mxu0 0.0
    %176 = vmatpush.msra.mxu0 %v77
    %177 = vmatpush.msra.mxu0 %v76
    %178 = vmatpush.msra.mxu0 %v75
    %179 = vmatpush.msra.mxu0 %v74
    %180 = vmatmul.f32.gmra.mxu0 %v162
    %v181 = vpop.f32.mrf.mxu0
    %v182 = vadd.f32 0.0, %v181
    %183 = vdwg.mxu0
    %v185 = vrot.slane %v182, 5
    %v187 = vadd.f32 %v72, %v185
    %v188 = vtanh.pop %v187
    %v190 = vrot.slane %v188, 3
    %v191 = vsel %vm50, %v190, 0
    %193 = vmatpush.msra.mxu0 0.0
    %194 = vmatpush.msra.mxu0 0.0
    %195 = vmatpush.msra.mxu0 0.0
    %196 = vmatpush.msra.mxu0 0.0
    %197 = vmatpush.msra.mxu0 0.0
    %198 = vmatpush.msra.mxu0 0.0
    %199 = vmatpush.msra.mxu0 0.0
    %200 = vmatpush.msra.mxu0 0.0
    %201 = vmatpush.msra.mxu0 0.0
    %202 = vmatpush.msra.mxu0 0.0
    %203 = vmatpush.msra.mxu0 0.0
    %204 = vmatpush.msra.mxu0 0.0
    %205 = vmatpush.msra.mxu0 %v77
    %206 = vmatpush.msra.mxu0 %v76
    %207 = vmatpush.msra.mxu0 %v75
    %208 = vmatpush.msra.mxu0 %v74
    %209 = vmatmul.f32.gmra.mxu0 %v191
    %v210 = vpop.f32.mrf.mxu0
    %v211 = vadd.f32 0.0, %v210
    %212 = vdwg.mxu0
    %v214 = vrot.slane %v211, 4
    %v216 = vadd.f32 %v72, %v214
    %v217 = vtanh.pop %v216
    %v219 = vrot.slane %v217, 4
    %v220 = vsel %vm50, %v219, 0
    %222 = vmatpush.msra.mxu0 0.0
    %223 = vmatpush.msra.mxu0 0.0
    %224 = vmatpush.msra.mxu0 0.0
    %225 = vmatpush.msra.mxu0 0.0
    %226 = vmatpush.msra.mxu0 0.0
    %227 = vmatpush.msra.mxu0 0.0
    %228 = vmatpush.msra.mxu0 0.0
    %229 = vmatpush.msra.mxu0 0.0
    %230 = vmatpush.msra.mxu0 0.0
    %231 = vmatpush.msra.mxu0 0.0
    %232 = vmatpush.msra.mxu0 0.0
    %233 = vmatpush.msra.mxu0 0.0
    %234 = vmatpush.msra.mxu0 %v77
    %235 = vmatpush.msra.mxu0 %v76
    %236 = vmatpush.msra.mxu0 %v75
    %237 = vmatpush.msra.mxu0 %v74
    %238 = vmatmul.f32.gmra.mxu0 %v220
    %v239 = vpop.f32.mrf.mxu0
    %v240 = vadd.f32 0.0, %v239
    %241 = vdwg.mxu0
    %v243 = vrot.slane %v240, 3
    %v245 = vadd.f32 %v72, %v243
    %v246 = vtanh.pop %v245
    %v248 = vrot.slane %v246, 5
    %v249 = vsel %vm50, %v248, 0
    %251 = vmatpush.msra.mxu0 0.0
    %252 = vmatpush.msra.mxu0 0.0
    %253 = vmatpush.msra.mxu0 0.0
    %254 = vmatpush.msra.mxu0 0.0
    %255 = vmatpush.msra.mxu0 0.0
    %256 = vmatpush.msra.mxu0 0.0
    %257 = vmatpush.msra.mxu0 0.0
    %258 = vmatpush.msra.mxu0 0.0
    %259 = vmatpush.msra.mxu0 0.0
    %260 = vmatpush.msra.mxu0 0.0
    %261 = vmatpush.msra.mxu0 0.0
    %262 = vmatpush.msra.mxu0 0.0
    %263 = vmatpush.msra.mxu0 %v77
    %264 = vmatpush.msra.mxu0 %v76
    %265 = vmatpush.msra.mxu0 %v75
    %266 = vmatpush.msra.mxu0 %v74
    %267 = vmatmul.f32.gmra.mxu0 %v249
    %v268 = vpop.f32.mrf.mxu0
    %v269 = vadd.f32 0.0, %v268
    %270 = vdwg.mxu0
    %v272 = vrot.slane %v269, 2
    %v274 = vadd.f32 %v72, %v272
    %v275 = vtanh.pop %v274
    %v277 = vrot.slane %v275, 6
    %v278 = vsel %vm50, %v277, 0
    %280 = vmatpush.msra.mxu0 0.0
    %281 = vmatpush.msra.mxu0 0.0
    %282 = vmatpush.msra.mxu0 0.0
    %283 = vmatpush.msra.mxu0 0.0
    %284 = vmatpush.msra.mxu0 0.0
    %285 = vmatpush.msra.mxu0 0.0
    %286 = vmatpush.msra.mxu0 0.0
    %287 = vmatpush.msra.mxu0 0.0
    %288 = vmatpush.msra.mxu0 0.0
    %289 = vmatpush.msra.mxu0 0.0
    %290 = vmatpush.msra.mxu0 0.0
    %291 = vmatpush.msra.mxu0 0.0
    %292 = vmatpush.msra.mxu0 %v77
    %293 = vmatpush.msra.mxu0 %v76
    %294 = vmatpush.msra.mxu0 %v75
    %295 = vmatpush.msra.mxu0 %v74
    %296 = vmatmul.f32.gmra.mxu0 %v278
    %v297 = vpop.f32.mrf.mxu0
    %v298 = vadd.f32 0.0, %v297
    %299 = vdwg.mxu0
    %v301 = vrot.slane %v298, 1
    %v303 = vadd.f32 %v72, %v301
    %v304 = vtanh.pop %v303
    %v305 = vld [vmem:[%s3] sm:$0xff]
    %v306 = vld [vmem:[%s3 + $0x8] sm:$0xff]
    %v307 = vld [vmem:[%s3 + $0x10] sm:$0xff]
    %v308 = vld [vmem:[%s3 + $0x18] sm:$0xff]
    %v309 = vld [vmem:[%s4] sm:$0x1]
    %v311 = vrot.slane %v304, 7
    %v312 = vsel %vm50, %v311, 0
    %314 = vmatpush.msra.mxu0 0.0
    %315 = vmatpush.msra.mxu0 0.0
    %316 = vmatpush.msra.mxu0 0.0
    %317 = vmatpush.msra.mxu0 0.0
    %318 = vmatpush.msra.mxu0 0.0
    %319 = vmatpush.msra.mxu0 0.0
    %320 = vmatpush.msra.mxu0 0.0
    %321 = vmatpush.msra.mxu0 0.0
    %322 = vmatpush.msra.mxu0 0.0
    %323 = vmatpush.msra.mxu0 0.0
    %324 = vmatpush.msra.mxu0 0.0
    %325 = vmatpush.msra.mxu0 0.0
    %326 = vmatpush.msra.mxu0 %v308
    %327 = vmatpush.msra.mxu0 %v307
    %328 = vmatpush.msra.mxu0 %v306
    %329 = vmatpush.msra.mxu0 %v305
    %330 = vmatmul.f32.gmra.mxu0 %v312
    %v331 = vpop.f32.mrf.mxu0
    %v332 = vadd.f32 %v309, %v331
    %333 = vdwg.mxu0
    %vm334 = vcmask 24576
    %v335 = vsel %vm334, %v332, -inf
    %336 = vmax.xlane.f32.xlu0 %v335
    %v337 = vpop.xlane.xlu0 %336
    %v338 = vsub.f32 %v332, %v337
    %v339 = vmul.f32 %v338, 1.442695
    %v340 = vpow.pop %v339
    %v341 = vsel %vm334, %v340, 0.0
    %342 = vadd.xlane.f32.xlu0 %v341
    %v343 = vpop.xlane.xlu0 %342
    %v344 = vrcp.pop %v343
    %v345 = vmul.f32 %v343, %v344
    %v346 = vsub.f32 1.0, %v345
    %v347 = vmul.f32 %v344, %v346
    %v348 = vadd.f32 %v344, %v347
    %vm349 = vweird.f32 %v343
    %vm350 = vweird.f32 %v344
    %vm351 = vmor %vm349, %vm350
    %v352 = vsel %vm351, %v344, %v348
    %v353 = vand.u32 2147483647, %v343
    %vm354 = vcmp.eq.f32.partialorder %v353, 8.507059e+37
    %v355 = vand.u32 %v343, 2147483648
    %v356 = vor.u32 1.1754944e-38, %v355
    %v357 = vsel %vm354, %v356, %v352
    %v358 = vmul.f32 %v340, %v357
    %359 = vst.msk [vmem:[#allocation5] sm:$0x1] %vm334, %v358
    // Predicated region
    $region26: #{tpu_custom_call.1} parent=1 // pred_check
      _
    $region27: #{tpu_custom_call.1} parent=1 // pred_check_branch
      %361 = sbr.rel (0) target = $region29
    $region28: #{tpu_custom_call.1} parent=1 // pred_region
      %363 = vsyncadd [#allocation4], 0
      %s365 = sshll.u32 [#allocation5], 4
      %s366 = int_to_ptr.vmem [resolvable:$true] %s365
      %s367 = sshll.u32 %s5, 4
      %s368 = int_to_ptr.hbm [resolvable:$true] %s367
      %370 = dma.vmem_to_hbm [thread:$0]  %s366, 16, %s368, [#allocation4]
    $region29: #{tpu_custom_call.1} parent=1 // pred_fallthru
      _
    // Predicated region
    $region30: #{tpu_custom_call.1} parent=1 // pred_check
      _
    $region31: #{tpu_custom_call.1} parent=1 // pred_check_branch
      %372 = sbr.rel (0) target = $region33
    $region32: #{tpu_custom_call.1} parent=1 // pred_region
      %374 = dma.done [#allocation4], 16
    $region33: #{tpu_custom_call.1} parent=1 // pred_fallthru
      _
    %375 = vsyncpa [#allocation3], 1
    %376 = vsyncpa [#allocation4], 1

</llo_original>
